<compile_context>
chip_gen: v7x
topology: tpu7x:2x2x1
jax: 0.10.0
libtpu: 0.0.40
codegen_flags: <defaults>
</compile_context>

<pallas_src>
import jax
import jax.numpy as jnp
from jax.experimental import pallas as pl
from jax.experimental.pallas import tpu as pltpu


def fractal_neuron_kernel(x_ref, w_ref, b_ref, ctx_ref, att_wt_ref,
                          logit_b_ref, out_ref):
    # Gated soma activation (gate already folded into w_ref / b_ref).
    soma_g = jnp.dot(x_ref[...], w_ref[...],
                     preferred_element_type=jnp.float32) + b_ref[...]

    # Attention logits; emotional-context contribution folded into logit_b.
    logits = jnp.dot(soma_g.astype(jnp.bfloat16), att_wt_ref[...],
                     preferred_element_type=jnp.float32) + logit_b_ref[...]

    # Row softmax (lane-dense, D_out multiple of 128); EUP approx reciprocal.
    m = jnp.max(logits, axis=-1, keepdims=True)
    e = jnp.exp(logits - m)
    inv_sum = pl.reciprocal(jnp.sum(e, axis=-1, keepdims=True), approx=True)
    att_w = e * inv_sum

    # Modulated soma (gated soma + emotional context), times attention weights.
    out_ref[...] = ((soma_g + ctx_ref[...]) * att_w).astype(out_ref.dtype)


def fractal_neuron_forward(x, params, *, tb=128):
    (dend_w, soma_w, soma_b, cur_emo, emo_emb, att_w, att_b) = params
    B, d_in = x.shape
    d_out = soma_w.shape[1]
    tb = min(tb, B)
    assert B % tb == 0, "batch must be a multiple of the batch tile"
    nb = B // tb

    # ---- wrapper-side exact algebraic hoists (all in f32) ------------------
    # Dendrites + soma weights folded into one matrix.
    w_fold = jnp.sum(dend_w, axis=0) @ soma_w                       # (d_in, d_out)

    # Batch-global activity gate, computed exactly in f32:
    #   mean(x @ w_fold + b) = dot(sum(x,0), sum(w_fold,1))/(B*d_out) + mean(b)
    soma_mean = (jnp.dot(jnp.sum(x, axis=0), jnp.sum(w_fold, axis=1))
                 / (B * d_out)) + jnp.mean(soma_b)
    gate = (soma_mean > 0.5).astype(jnp.float32)                    # scalar

    # Fold the gate into the effective soma weights/bias (exact: 0 or 1).
    w_eff = (w_fold * gate).astype(jnp.bfloat16)                    # (d_in, d_out)
    b_eff = (soma_b * gate).reshape(1, d_out).astype(jnp.float32)   # (1, d_out)

    # Emotional context and its contribution to the attention logits.
    ctx = jax.nn.softmax(cur_emo, axis=0) @ emo_emb                 # (d_out,)
    logit_bias = (ctx @ att_w.T + att_b).reshape(1, d_out).astype(jnp.float32)
    ctx_row = ctx.reshape(1, d_out).astype(jnp.float32)

    # Pre-transpose attention weights once; plain (K,N) contraction in-kernel.
    att_wt = att_w.T.astype(jnp.bfloat16)                           # (d_out, d_out)

    x_bf = x.astype(jnp.bfloat16)

    grid_spec = pltpu.PrefetchScalarGridSpec(
        num_scalar_prefetch=0,
        grid=(nb,),                                                 # batch tiles only
        in_specs=[
            pl.BlockSpec((tb, d_in), lambda b: (b, 0)),             # x tile (pipelined)
            pl.BlockSpec((d_in, d_out), lambda b: (0, 0)),          # gated folded weight
            pl.BlockSpec((1, d_out), lambda b: (0, 0)),             # gated soma bias
            pl.BlockSpec((1, d_out), lambda b: (0, 0)),             # emotional context
            pl.BlockSpec((d_out, d_out), lambda b: (0, 0)),         # att_w.T (resident)
            pl.BlockSpec((1, d_out), lambda b: (0, 0)),             # folded logit bias
        ],
        out_specs=pl.BlockSpec((tb, d_out), lambda b: (b, 0)),
    )

    return pl.pallas_call(
        fractal_neuron_kernel,
        out_shape=jax.ShapeDtypeStruct((B, d_out), jnp.float32),
        grid_spec=grid_spec,
        compiler_params=pltpu.CompilerParams(
            # No cross-tile dependency remains -> batch axis is parallel
            # (shards across the 2 TensorCores on v7x; no-op on v5e/v6e).
            dimension_semantics=("parallel",),
            vmem_limit_bytes=32 * 1024 * 1024,
        ),
    )(x_bf, w_eff, b_eff, ctx_row, att_wt, logit_bias)


def init_params(key, input_dim, output_dim, num_emotions=5, num_dendrites=5,
                weight_scale=0.05, soma_bias=0.75):
    # Same structure as the PyTorch module; weights scaled so the softmax
    # logits are O(1) and the numeric comparison is well conditioned.
    ks = jax.random.split(key, 6)
    dend_w = weight_scale * jax.random.normal(
        ks[0], (num_dendrites, input_dim, output_dim), jnp.float32)
    soma_w = weight_scale * jax.random.normal(
        ks[1], (output_dim, output_dim), jnp.float32)
    soma_b = jnp.full((output_dim,), soma_bias, jnp.float32)
    cur_emo = 0.5 * jax.random.normal(ks[2], (num_emotions,), jnp.float32)
    emo_emb = weight_scale * jax.random.normal(
        ks[3], (num_emotions, output_dim), jnp.float32)
    bound = output_dim ** -0.5   # nn.Linear(output_dim, output_dim) default init
    att_w = jax.random.uniform(ks[4], (output_dim, output_dim), jnp.float32, -bound, bound)
    att_b = jax.random.uniform(ks[5], (output_dim,), jnp.float32, -bound, bound)
    return (dend_w, soma_w, soma_b, cur_emo, emo_emb, att_w, att_b)


def reference_forward(x, params):
    """Pure-JAX f32 reference mirroring the PyTorch forward exactly."""
    (dend_w, soma_w, soma_b, cur_emo, emo_emb, att_w, att_b) = params
    dend = sum(x @ dend_w[i] for i in range(dend_w.shape[0]))
    soma = dend @ soma_w + soma_b
    soma = jnp.where(jnp.mean(soma) > 0.5, soma, jnp.zeros_like(soma))
    soma = soma + jax.nn.softmax(cur_emo, axis=0) @ emo_emb
    attw = jax.nn.softmax(soma @ att_w.T + att_b, axis=1)
    return soma * attw


if __name__ == "__main__":
    B, D_in, D_out = 64, 128, 128
    key = jax.random.PRNGKey(0)
    kx, kp = jax.random.split(key)
    x = jax.random.normal(kx, (B, D_in), jnp.float32)

    # Case 1: positive soma bias -> batch mean > 0.5 -> gate passes soma through.
    params_on = init_params(kp, D_in, D_out, soma_bias=0.75)
    out_on = jax.block_until_ready(fractal_neuron_forward(x, params_on))
    ref_on = reference_forward(x, params_on)
    assert out_on.shape == (B, D_out)
    assert bool(jnp.all(jnp.isfinite(out_on)))
    assert jnp.allclose(out_on, ref_on, rtol=3e-2, atol=3e-2), "mismatch (gate open)"

    # Case 2: zero soma bias -> batch mean < 0.5 -> gate zeroes the soma.
    params_off = init_params(kp, D_in, D_out, soma_bias=0.0)
    out_off = jax.block_until_ready(fractal_neuron_forward(x, params_off))
    ref_off = reference_forward(x, params_off)
    assert jnp.allclose(out_off, ref_off, rtol=3e-2, atol=3e-2), "mismatch (gate closed)"

    print("KERNEL_OK")
</pallas_src>

<mosaic_0001>
module attributes {stable_mosaic.version = 11 : i64} {
  func.func @fractal_neuron_kernel(%arg0: i32, %arg1: memref<64x128xbf16, #tpu.memory_space<vmem>>, %arg2: memref<128x128xbf16, #tpu.memory_space<vmem>>, %arg3: memref<1x128xf32, #tpu.memory_space<vmem>>, %arg4: memref<1x128xf32, #tpu.memory_space<vmem>>, %arg5: memref<128x128xbf16, #tpu.memory_space<vmem>>, %arg6: memref<1x128xf32, #tpu.memory_space<vmem>>, %arg7: memref<64x128xf32, #tpu.memory_space<vmem>>) attributes {dimension_semantics = [#tpu.dimension_semantics<parallel>], iteration_bounds = array<i64: 1>, scalar_prefetch = 0 : i64, scratch_operands = 0 : i64, tpu.core_type = #tpu.core_type<tc>, window_params = [{transform_indices = @transform_0, window_bounds = array<i64: 64, 128>}, {pipeline_mode = #tpu.pipeline_mode<synchronous>, transform_indices = @transform_1, window_bounds = array<i64: 128, 128>}, {pipeline_mode = #tpu.pipeline_mode<synchronous>, transform_indices = @transform_2, window_bounds = array<i64: 1, 128>}, {pipeline_mode = #tpu.pipeline_mode<synchronous>, transform_indices = @transform_3, window_bounds = array<i64: 1, 128>}, {pipeline_mode = #tpu.pipeline_mode<synchronous>, transform_indices = @transform_4, window_bounds = array<i64: 128, 128>}, {pipeline_mode = #tpu.pipeline_mode<synchronous>, transform_indices = @transform_5, window_bounds = array<i64: 1, 128>}, {transform_indices = @transform_6, window_bounds = array<i64: 64, 128>}]} {
    %c0 = arith.constant 0 : index
    %c0_0 = arith.constant 0 : index
    %0 = vector.load %arg1[%c0, %c0_0] : memref<64x128xbf16, #tpu.memory_space<vmem>>, vector<64x128xbf16>
    %c0_1 = arith.constant 0 : index
    %c0_2 = arith.constant 0 : index
    %1 = vector.load %arg2[%c0_1, %c0_2] : memref<128x128xbf16, #tpu.memory_space<vmem>>, vector<128x128xbf16>
    %cst = arith.constant dense<0.000000e+00> : vector<64x128xf32>
    %2 = tpu.matmul %0, %1, %cst {dimension_numbers = #tpu.dot_dimension_numbers<[1], [0], [0], [1], [0, 0, 1, 1], [], []>} : vector<64x128xbf16>, vector<128x128xbf16>, vector<64x128xf32> -> vector<64x128xf32>
    %c0_3 = arith.constant 0 : index
    %c0_4 = arith.constant 0 : index
    %3 = vector.load %arg3[%c0_3, %c0_4] : memref<1x128xf32, #tpu.memory_space<vmem>>, vector<1x128xf32>
    %4 = vector.broadcast %3 : vector<1x128xf32> to vector<64x128xf32>
    %5 = arith.addf %2, %4 : vector<64x128xf32>
    %6 = arith.truncf %5 : vector<64x128xf32> to vector<64x128xbf16>
    %c0_5 = arith.constant 0 : index
    %c0_6 = arith.constant 0 : index
    %7 = vector.load %arg5[%c0_5, %c0_6] : memref<128x128xbf16, #tpu.memory_space<vmem>>, vector<128x128xbf16>
    %cst_7 = arith.constant dense<0.000000e+00> : vector<64x128xf32>
    %8 = tpu.matmul %6, %7, %cst_7 {dimension_numbers = #tpu.dot_dimension_numbers<[1], [0], [0], [1], [0, 0, 1, 1], [], []>} : vector<64x128xbf16>, vector<128x128xbf16>, vector<64x128xf32> -> vector<64x128xf32>
    %c0_8 = arith.constant 0 : index
    %c0_9 = arith.constant 0 : index
    %9 = vector.load %arg6[%c0_8, %c0_9] : memref<1x128xf32, #tpu.memory_space<vmem>>, vector<1x128xf32>
    %10 = vector.broadcast %9 : vector<1x128xf32> to vector<64x128xf32>
    %11 = arith.addf %8, %10 : vector<64x128xf32>
    %cst_10 = arith.constant dense<0xFF800000> : vector<64xf32>
    %12 = vector.multi_reduction <maximumf>, %11, %cst_10 [1] : vector<64x128xf32> to vector<64xf32>
    %13 = vector.shape_cast %12 : vector<64xf32> to vector<64x1xf32>
    %14 = vector.broadcast %13 : vector<64x1xf32> to vector<64x128xf32>
    %15 = arith.subf %11, %14 : vector<64x128xf32>
    %16 = math.exp %15 : vector<64x128xf32>
    %cst_11 = arith.constant dense<0.000000e+00> : vector<64xf32>
    %17 = vector.multi_reduction <add>, %16, %cst_11 [1] : vector<64x128xf32> to vector<64xf32>
    %18 = vector.shape_cast %17 : vector<64xf32> to vector<64x1xf32>
    %19 = tpu.reciprocal %18 {approx = true} : vector<64x1xf32> -> vector<64x1xf32>
    %20 = vector.broadcast %19 : vector<64x1xf32> to vector<64x128xf32>
    %21 = arith.mulf %16, %20 : vector<64x128xf32>
    %c0_12 = arith.constant 0 : index
    %c0_13 = arith.constant 0 : index
    %22 = vector.load %arg4[%c0_12, %c0_13] : memref<1x128xf32, #tpu.memory_space<vmem>>, vector<1x128xf32>
    %23 = vector.broadcast %22 : vector<1x128xf32> to vector<64x128xf32>
    %24 = arith.addf %5, %23 : vector<64x128xf32>
    %25 = arith.mulf %24, %21 : vector<64x128xf32>
    %c0_14 = arith.constant 0 : index
    %c0_15 = arith.constant 0 : index
    %26 = vector.load %arg7[%c0_14, %c0_15] : memref<64x128xf32, #tpu.memory_space<vmem>>, vector<64x128xf32>
    tpu.vector_store %arg7[%c0_14, %c0_15], %25 {strides = array<i32>} : memref<64x128xf32, #tpu.memory_space<vmem>>, vector<64x128xf32>,
    return
  }
  func.func @transform_0(%arg0: i32) -> (i32, i32) {
    %c0_i32 = arith.constant 0 : i32
    %c0_i32_0 = arith.constant 0 : i32
    return %arg0, %c0_i32 : i32, i32
  }
  func.func @transform_1(%arg0: i32) -> (i32, i32) {
    %c0_i32 = arith.constant 0 : i32
    %c0_i32_0 = arith.constant 0 : i32
    %c0_i32_1 = arith.constant 0 : i32
    return %c0_i32, %c0_i32_0 : i32, i32
  }
  func.func @transform_2(%arg0: i32) -> (i32, i32) {
    %c0_i32 = arith.constant 0 : i32
    %c0_i32_0 = arith.constant 0 : i32
    %c0_i32_1 = arith.constant 0 : i32
    return %c0_i32, %c0_i32_0 : i32, i32
  }
  func.func @transform_3(%arg0: i32) -> (i32, i32) {
    %c0_i32 = arith.constant 0 : i32
    %c0_i32_0 = arith.constant 0 : i32
    %c0_i32_1 = arith.constant 0 : i32
    return %c0_i32, %c0_i32_0 : i32, i32
  }
  func.func @transform_4(%arg0: i32) -> (i32, i32) {
    %c0_i32 = arith.constant 0 : i32
    %c0_i32_0 = arith.constant 0 : i32
    %c0_i32_1 = arith.constant 0 : i32
    return %c0_i32, %c0_i32_0 : i32, i32
  }
  func.func @transform_5(%arg0: i32) -> (i32, i32) {
    %c0_i32 = arith.constant 0 : i32
    %c0_i32_0 = arith.constant 0 : i32
    %c0_i32_1 = arith.constant 0 : i32
    return %c0_i32, %c0_i32_0 : i32, i32
  }
  func.func @transform_6(%arg0: i32) -> (i32, i32) {
    %c0_i32 = arith.constant 0 : i32
    %c0_i32_0 = arith.constant 0 : i32
    return %arg0, %c0_i32 : i32, i32
  }
}

</mosaic_0001>

<llo_original>
// kernel: tpu_custom_call.1
$region0: #{tpu_custom_call.1}
  #allocation0 [shape = 'u32[]', space=smem, size = 0x4, offset = 0x4, fixed_abs, tag = 'smem constant byte address 0x4 - core index']
  #allocation1 [shape = 'u32[144,128]{1,0:T(1,128)}', space=vmem, size = 0x12000, scoped, tag = 'internal scratch']
  %s0 = inlined_call_operand.hbm [shape: bf16[64,128], index: 0, kind: input, shape index: {}]
  %s1 = inlined_call_operand.hbm [shape: bf16[128,128], index: 1, kind: input, shape index: {}]
  %s2 = inlined_call_operand.vmem [shape: f32[1,128], index: 2, kind: input, shape index: {}]
  %s3 = inlined_call_operand.vmem [shape: f32[1,128], index: 3, kind: input, shape index: {}]
  %s4 = inlined_call_operand.hbm [shape: bf16[128,128], index: 4, kind: input, shape index: {}]
  %s5 = inlined_call_operand.vmem [shape: f32[1,128], index: 5, kind: input, shape index: {}]
  %s6 = inlined_call_operand.hbm [shape: f32[64,128], index: 6, kind: output, shape index: {}]
  %s7 = sld [smem:[#allocation0]]
  $region46: #{tpu_custom_call.1} parent=0
    _
  %s9 = ssub.s32 1, %s7
  %s10 = scalar_select 0, %s9, %s7
  $region1: #{tpu_custom_call.1} parent=0
    #allocation2 [shape = 'u8[16384]{0}', space=vmem, size = 0x4000, scoped, tag = 'input window, operand 0, single buffered']
    #allocation3 [shape = 's32[1]{0}', space=sflag, size = 0x4, scoped, tag = 'scoped memory for tpu_custom_call.1']
    #allocation4 [shape = 's32[1]{0}', space=sflag, size = 0x4, scoped, tag = 'scoped memory for tpu_custom_call.1']
    #allocation5 [shape = 'u8[32768]{0}', space=vmem, size = 0x8000, scoped, tag = 'input window, operand 1, single buffered']
    #allocation6 [shape = 's32[1]{0}', space=sflag, size = 0x4, scoped, tag = 'scoped memory for tpu_custom_call.1']
    #allocation7 [shape = 'u8[32768]{0}', space=vmem, size = 0x8000, scoped, tag = 'input window, operand 4, single buffered']
    #allocation8 [shape = 'u8[32768]{0}', space=vmem, size = 0x8000, scoped, tag = 'output window, operand 0, single buffered']
    %11 = vsyncpa [#allocation3], 0
    %12 = vsyncpa [#allocation6], 0
    %13 = vsyncpa [#allocation4], 0
    // Predicated region
    $region2: #{tpu_custom_call.1} parent=1 // pred_check
      _
    $region3: #{tpu_custom_call.1} parent=1 // pred_check_branch
      %15 = sbr.rel (0) target = $region5
    $region4: #{tpu_custom_call.1} parent=1 // pred_region
      %s17 = ssub.s32 512, 512
      %18 = vsyncadd [#allocation3], %s17
      %s19 = sshll.u32 [#allocation2], 4
      %s20 = int_to_ptr.vmem [resolvable:$true] %s19
      %25 = dma.hbm_to_vmem [thread:$0]  %s0, 512, %s20, [#allocation3], 64, 64, 4
    $region5: #{tpu_custom_call.1} parent=1 // pred_fallthru
      _
    // Predicated region
    $region6: #{tpu_custom_call.1} parent=1 // pred_check
      _
    $region7: #{tpu_custom_call.1} parent=1 // pred_check_branch
      %27 = sbr.rel (0) target = $region9
    $region8: #{tpu_custom_call.1} parent=1 // pred_region
      %s29 = ssub.s32 1024, 1024
      %30 = vsyncadd [#allocation6], %s29
      %s31 = sshll.u32 [#allocation5], 4
      %s32 = int_to_ptr.vmem [resolvable:$true] %s31
      %37 = dma.hbm_to_vmem [thread:$0]  %s1, 1024, %s32, [#allocation6], 64, 64, 4
    $region9: #{tpu_custom_call.1} parent=1 // pred_fallthru
      _
    // Predicated region
    $region10: #{tpu_custom_call.1} parent=1 // pred_check
      _
    $region11: #{tpu_custom_call.1} parent=1 // pred_check_branch
      %39 = sbr.rel (0) target = $region13
    $region12: #{tpu_custom_call.1} parent=1 // pred_region
      _
    $region13: #{tpu_custom_call.1} parent=1 // pred_fallthru
      _
    // Predicated region
    $region14: #{tpu_custom_call.1} parent=1 // pred_check
      _
    $region15: #{tpu_custom_call.1} parent=1 // pred_check_branch
      %41 = sbr.rel (0) target = $region17
    $region16: #{tpu_custom_call.1} parent=1 // pred_region
      _
    $region17: #{tpu_custom_call.1} parent=1 // pred_fallthru
      _
    // Predicated region
    $region18: #{tpu_custom_call.1} parent=1 // pred_check
      _
    $region19: #{tpu_custom_call.1} parent=1 // pred_check_branch
      %43 = sbr.rel (0) target = $region21
    $region20: #{tpu_custom_call.1} parent=1 // pred_region
      %s45 = ssub.s32 1024, 1024
      %46 = vsyncadd [#allocation6], %s45
      %s47 = sshll.u32 [#allocation7], 4
      %s48 = int_to_ptr.vmem [resolvable:$true] %s47
      %53 = dma.hbm_to_vmem [thread:$0]  %s4, 1024, %s48, [#allocation6], 64, 64, 4
    $region21: #{tpu_custom_call.1} parent=1 // pred_fallthru
      _
    // Predicated region
    $region22: #{tpu_custom_call.1} parent=1 // pred_check
      _
    $region23: #{tpu_custom_call.1} parent=1 // pred_check_branch
      %55 = sbr.rel (0) target = $region25
    $region24: #{tpu_custom_call.1} parent=1 // pred_region
      _
    $region25: #{tpu_custom_call.1} parent=1 // pred_fallthru
      _
    // Predicated region
    $region26: #{tpu_custom_call.1} parent=1 // pred_check
      _
    $region27: #{tpu_custom_call.1} parent=1 // pred_check_branch
      %57 = sbr.rel (0) target = $region29
    $region28: #{tpu_custom_call.1} parent=1 // pred_region
      %58 = dma.done [#allocation3], 512
    $region29: #{tpu_custom_call.1} parent=1 // pred_fallthru
      _
    // Predicated region
    $region30: #{tpu_custom_call.1} parent=1 // pred_check
      _
    $region31: #{tpu_custom_call.1} parent=1 // pred_check_branch
      %60 = sbr.rel (0) target = $region33
    $region32: #{tpu_custom_call.1} parent=1 // pred_region
      %61 = dma.done [#allocation6], 1024
    $region33: #{tpu_custom_call.1} parent=1 // pred_fallthru
      _
    // Predicated region
    $region34: #{tpu_custom_call.1} parent=1 // pred_check
      _
    $region35: #{tpu_custom_call.1} parent=1 // pred_check_branch
      %63 = sbr.rel (0) target = $region37
    $region36: #{tpu_custom_call.1} parent=1 // pred_region
      %64 = dma.done [#allocation6], 1024
    $region37: #{tpu_custom_call.1} parent=1 // pred_fallthru
      _
    %v66 = vld [vmem:[#allocation2] sm:$0xf]
    %v67 = vld [vmem:[#allocation2 + $0x4] sm:$0xf]
    %v68 = vld [vmem:[#allocation2 + $0x8] sm:$0xf]
    %v69 = vld [vmem:[#allocation2 + $0xc] sm:$0xf]
    %v70 = vld [vmem:[#allocation2 + $0x10] sm:$0xf]
    %v71 = vld [vmem:[#allocation2 + $0x14] sm:$0xf]
    %v72 = vld [vmem:[#allocation2 + $0x18] sm:$0xf]
    %v73 = vld [vmem:[#allocation2 + $0x1c] sm:$0xf]
    %v74 = vld [vmem:[#allocation5] sm:$0xf]
    %v75 = vld [vmem:[#allocation5 + $0x4] sm:$0xf]
    %v76 = vld [vmem:[#allocation5 + $0x8] sm:$0xf]
    %v77 = vld [vmem:[#allocation5 + $0xc] sm:$0xf]
    %v78 = vld [vmem:[#allocation5 + $0x10] sm:$0xf]
    %v79 = vld [vmem:[#allocation5 + $0x14] sm:$0xf]
    %v80 = vld [vmem:[#allocation5 + $0x18] sm:$0xf]
    %v81 = vld [vmem:[#allocation5 + $0x1c] sm:$0xf]
    %v82 = vld [vmem:[#allocation5 + $0x20] sm:$0xf]
    %v83 = vld [vmem:[#allocation5 + $0x24] sm:$0xf]
    %v84 = vld [vmem:[#allocation5 + $0x28] sm:$0xf]
    %v85 = vld [vmem:[#allocation5 + $0x2c] sm:$0xf]
    %v86 = vld [vmem:[#allocation5 + $0x30] sm:$0xf]
    %v87 = vld [vmem:[#allocation5 + $0x34] sm:$0xf]
    %v88 = vld [vmem:[#allocation5 + $0x38] sm:$0xf]
    %v89 = vld [vmem:[#allocation5 + $0x3c] sm:$0xf]
    %v90 = vld [vmem:[%s2] sm:$0x1]
    %v92 = vlaneseq
    %v93 = vshrl.u32 %v92, 7
    %v94 = vsub.s32 0, %v93
    %v95 = vrot.slane %v90, %v94
    %v105 = vunpack.c.l.b16 %v66
    %v106 = vunpack.c.l.b16 %v67
    %v107 = vunpack.c.l.b16 %v68
    %v108 = vunpack.c.l.b16 %v69
    %v109 = vunpack.c.l.b16 %v70
    %v110 = vunpack.c.l.b16 %v71
    %v111 = vunpack.c.l.b16 %v72
    %v112 = vunpack.c.l.b16 %v73
    %v113 = vpack.c.b16 %v106, %v105
    %v114 = vpack.c.b16 %v108, %v107
    %v115 = vpack.c.b16 %v110, %v109
    %v116 = vpack.c.b16 %v112, %v111
    %v137 = vunpack.c.l.b16 %v74
    %v138 = vunpack.c.l.b16 %v75
    %v139 = vunpack.c.l.b16 %v76
    %v140 = vunpack.c.l.b16 %v77
    %v141 = vunpack.c.l.b16 %v78
    %v142 = vunpack.c.l.b16 %v79
    %v143 = vunpack.c.l.b16 %v80
    %v144 = vunpack.c.l.b16 %v81
    %v145 = vunpack.c.l.b16 %v82
    %v146 = vunpack.c.l.b16 %v83
    %v147 = vunpack.c.l.b16 %v84
    %v148 = vunpack.c.l.b16 %v85
    %v149 = vunpack.c.l.b16 %v86
    %v150 = vunpack.c.l.b16 %v87
    %v151 = vunpack.c.l.b16 %v88
    %v152 = vunpack.c.l.b16 %v89
    %v153 = vpack.c.b16 %v138, %v137
    %v154 = vpack.c.b16 %v140, %v139
    %v155 = vpack.c.b16 %v142, %v141
    %v156 = vpack.c.b16 %v144, %v143
    %v157 = vpack.c.b16 %v146, %v145
    %v158 = vpack.c.b16 %v148, %v147
    %v159 = vpack.c.b16 %v150, %v149
    %v160 = vpack.c.b16 %v152, %v151
    %169 = vmatprep.subr.bf16.mxu0 0
    %170 = vmatpush1.bf16.msra.mxu0 %v153
    %171 = vmatprep.subr.bf16.mxu0 0
    %172 = vmatpush1.bf16.msra.mxu0 %v154
    %173 = vmatprep.subr.bf16.mxu0 0
    %174 = vmatpush1.bf16.msra.mxu0 %v155
    %175 = vmatprep.subr.bf16.mxu0 0
    %176 = vmatpush1.bf16.msra.mxu0 %v156
    %177 = vmatprep.subr.bf16.mxu0 0
    %178 = vmatpush1.bf16.msra.mxu0 %v157
    %179 = vmatprep.subr.bf16.mxu0 0
    %180 = vmatpush1.bf16.msra.mxu0 %v158
    %181 = vmatprep.subr.bf16.mxu0 0
    %182 = vmatpush1.bf16.msra.mxu0 %v159
    %183 = vmatprep.subr.bf16.mxu0 0
    %184 = vmatpush1.bf16.msra.mxu0 %v160
    %185 = vmatprep.subr.bf16.mxu0 0
    %186 = vmatpush1.bf16.msra.mxu0 0
    %187 = vmatprep.subr.bf16.mxu0 0
    %188 = vmatpush1.bf16.msra.mxu0 0
    %189 = vmatprep.subr.bf16.mxu0 0
    %190 = vmatpush1.bf16.msra.mxu0 0
    %191 = vmatprep.subr.bf16.mxu0 0
    %192 = vmatpush1.bf16.msra.mxu0 0
    %193 = vmatprep.subr.bf16.mxu0 0
    %194 = vmatpush1.bf16.msra.mxu0 0
    %195 = vmatprep.subr.bf16.mxu0 0
    %196 = vmatpush1.bf16.msra.mxu0 0
    %197 = vmatprep.subr.bf16.mxu0 0
    %198 = vmatpush1.bf16.msra.mxu0 0
    %199 = vmatprep.subr.bf16.mxu0 0
    %200 = vmatpush1.bf16.msra.mxu0 0
    %201 = vmatprep.mubr.bf16.mxu0 0
    %202 = vmatmul.mubr.bf16.gmra.mrb[0].mxu0 %v113
    %v203 = vpop.f32.mrb[0].mxu0
    %v204 = vadd.f32 %v95, %v203
    %v205 = vpop.f32.mrb[0].mxu0
    %v206 = vpop.f32.mrb[0].mxu0
    %v207 = vadd.f32 %v95, %v206
    %v208 = vpop.f32.mrb[0].mxu0
    %209 = vmatprep.mubr.bf16.mxu0 0
    %210 = vmatmul.mubr.bf16.gmra.mrb[0].mxu0 %v114
    %v211 = vpop.f32.mrb[0].mxu0
    %v212 = vadd.f32 %v95, %v211
    %v213 = vpop.f32.mrb[0].mxu0
    %v214 = vpop.f32.mrb[0].mxu0
    %v215 = vadd.f32 %v95, %v214
    %v216 = vpop.f32.mrb[0].mxu0
    %217 = vmatprep.mubr.bf16.mxu0 0
    %218 = vmatmul.mubr.bf16.gmra.mrb[0].mxu0 %v115
    %v219 = vpop.f32.mrb[0].mxu0
    %v220 = vadd.f32 %v95, %v219
    %v221 = vpop.f32.mrb[0].mxu0
    %v222 = vpop.f32.mrb[0].mxu0
    %v223 = vadd.f32 %v95, %v222
    %v224 = vpop.f32.mrb[0].mxu0
    %225 = vmatprep.mubr.bf16.mxu0 0
    %226 = vmatmul.mubr.bf16.gmra.mrb[0].mxu0 %v116
    %v227 = vpop.f32.mrb[0].mxu0
    %v228 = vadd.f32 %v95, %v227
    %v229 = vpop.f32.mrb[0].mxu0
    %v230 = vpop.f32.mrb[0].mxu0
    %v231 = vadd.f32 %v95, %v230
    %v232 = vpop.f32.mrb[0].mxu0
    %233 = vdwg.mxu0
    %v234 = vpack.c.bf16 %v207, %v204
    %v235 = vpack.c.bf16 %v215, %v212
    %v236 = vpack.c.bf16 %v223, %v220
    %v237 = vpack.c.bf16 %v231, %v228
    %v238 = vld [vmem:[#allocation7] sm:$0xf]
    %v239 = vld [vmem:[#allocation7 + $0x4] sm:$0xf]
    %v240 = vld [vmem:[#allocation7 + $0x8] sm:$0xf]
    %v241 = vld [vmem:[#allocation7 + $0xc] sm:$0xf]
    %v242 = vld [vmem:[#allocation7 + $0x10] sm:$0xf]
    %v243 = vld [vmem:[#allocation7 + $0x14] sm:$0xf]
    %v244 = vld [vmem:[#allocation7 + $0x18] sm:$0xf]
    %v245 = vld [vmem:[#allocation7 + $0x1c] sm:$0xf]
    %v246 = vld [vmem:[#allocation7 + $0x20] sm:$0xf]
    %v247 = vld [vmem:[#allocation7 + $0x24] sm:$0xf]
    %v248 = vld [vmem:[#allocation7 + $0x28] sm:$0xf]
    %v249 = vld [vmem:[#allocation7 + $0x2c] sm:$0xf]
    %v250 = vld [vmem:[#allocation7 + $0x30] sm:$0xf]
    %v251 = vld [vmem:[#allocation7 + $0x34] sm:$0xf]
    %v252 = vld [vmem:[#allocation7 + $0x38] sm:$0xf]
    %v253 = vld [vmem:[#allocation7 + $0x3c] sm:$0xf]
    %v254 = vld [vmem:[%s5] sm:$0x1]
    %v256 = vlaneseq
    %v257 = vshrl.u32 %v256, 7
    %v258 = vsub.s32 0, %v257
    %v259 = vrot.slane %v254, %v258
    %v277 = vunpack.c.l.b16 %v238
    %v278 = vunpack.c.l.b16 %v239
    %v279 = vunpack.c.l.b16 %v240
    %v280 = vunpack.c.l.b16 %v241
    %v281 = vunpack.c.l.b16 %v242
    %v282 = vunpack.c.l.b16 %v243
    %v283 = vunpack.c.l.b16 %v244
    %v284 = vunpack.c.l.b16 %v245
    %v285 = vunpack.c.l.b16 %v246
    %v286 = vunpack.c.l.b16 %v247
    %v287 = vunpack.c.l.b16 %v248
    %v288 = vunpack.c.l.b16 %v249
    %v289 = vunpack.c.l.b16 %v250
    %v290 = vunpack.c.l.b16 %v251
    %v291 = vunpack.c.l.b16 %v252
    %v292 = vunpack.c.l.b16 %v253
    %v293 = vpack.c.b16 %v278, %v277
    %v294 = vpack.c.b16 %v280, %v279
    %v295 = vpack.c.b16 %v282, %v281
    %v296 = vpack.c.b16 %v284, %v283
    %v297 = vpack.c.b16 %v286, %v285
    %v298 = vpack.c.b16 %v288, %v287
    %v299 = vpack.c.b16 %v290, %v289
    %v300 = vpack.c.b16 %v292, %v291
    %309 = vmatprep.subr.bf16.mxu0 0
    %310 = vmatpush1.bf16.msra.mxu0 %v293
    %311 = vmatprep.subr.bf16.mxu0 0
    %312 = vmatpush1.bf16.msra.mxu0 %v294
    %313 = vmatprep.subr.bf16.mxu0 0
    %314 = vmatpush1.bf16.msra.mxu0 %v295
    %315 = vmatprep.subr.bf16.mxu0 0
    %316 = vmatpush1.bf16.msra.mxu0 %v296
    %317 = vmatprep.subr.bf16.mxu0 0
    %318 = vmatpush1.bf16.msra.mxu0 %v297
    %319 = vmatprep.subr.bf16.mxu0 0
    %320 = vmatpush1.bf16.msra.mxu0 %v298
    %321 = vmatprep.subr.bf16.mxu0 0
    %322 = vmatpush1.bf16.msra.mxu0 %v299
    %323 = vmatprep.subr.bf16.mxu0 0
    %324 = vmatpush1.bf16.msra.mxu0 %v300
    %325 = vmatprep.subr.bf16.mxu0 0
    %326 = vmatpush1.bf16.msra.mxu0 0
    %327 = vmatprep.subr.bf16.mxu0 0
    %328 = vmatpush1.bf16.msra.mxu0 0
    %329 = vmatprep.subr.bf16.mxu0 0
    %330 = vmatpush1.bf16.msra.mxu0 0
    %331 = vmatprep.subr.bf16.mxu0 0
    %332 = vmatpush1.bf16.msra.mxu0 0
    %333 = vmatprep.subr.bf16.mxu0 0
    %334 = vmatpush1.bf16.msra.mxu0 0
    %335 = vmatprep.subr.bf16.mxu0 0
    %336 = vmatpush1.bf16.msra.mxu0 0
    %337 = vmatprep.subr.bf16.mxu0 0
    %338 = vmatpush1.bf16.msra.mxu0 0
    %339 = vmatprep.subr.bf16.mxu0 0
    %340 = vmatpush1.bf16.msra.mxu0 0
    %341 = vmatprep.mubr.bf16.mxu0 0
    %342 = vmatmul.mubr.bf16.gmra.mrb[0].mxu0 %v234
    %v343 = vpop.f32.mrb[0].mxu0
    %v344 = vadd.f32 %v259, %v343
    %v345 = vpop.f32.mrb[0].mxu0
    %v346 = vpop.f32.mrb[0].mxu0
    %v347 = vadd.f32 %v259, %v346
    %v348 = vpop.f32.mrb[0].mxu0
    %349 = vmatprep.mubr.bf16.mxu0 0
    %350 = vmatmul.mubr.bf16.gmra.mrb[0].mxu0 %v235
    %v351 = vpop.f32.mrb[0].mxu0
    %v352 = vadd.f32 %v259, %v351
    %v353 = vpop.f32.mrb[0].mxu0
    %v354 = vpop.f32.mrb[0].mxu0
    %v355 = vadd.f32 %v259, %v354
    %v356 = vpop.f32.mrb[0].mxu0
    %357 = vmatprep.mubr.bf16.mxu0 0
    %358 = vmatmul.mubr.bf16.gmra.mrb[0].mxu0 %v236
    %v359 = vpop.f32.mrb[0].mxu0
    %v360 = vadd.f32 %v259, %v359
    %v361 = vpop.f32.mrb[0].mxu0
    %v362 = vpop.f32.mrb[0].mxu0
    %v363 = vadd.f32 %v259, %v362
    %v364 = vpop.f32.mrb[0].mxu0
    %365 = vmatprep.mubr.bf16.mxu0 0
    %366 = vmatmul.mubr.bf16.gmra.mrb[0].mxu0 %v237
    %v367 = vpop.f32.mrb[0].mxu0
    %v368 = vadd.f32 %v259, %v367
    %v369 = vpop.f32.mrb[0].mxu0
    %v370 = vpop.f32.mrb[0].mxu0
    %v371 = vadd.f32 %v259, %v370
    %v372 = vpop.f32.mrb[0].mxu0
    %373 = vdwg.mxu0
    %374 = vmax.xlane.f32.xlu0 %v344
    %v375 = vpop.xlane.xlu0 %374
    %376 = vmax.xlane.f32.xlu0 %v347
    %v377 = vpop.xlane.xlu0 %376
    %378 = vmax.xlane.f32.xlu0 %v352
    %v379 = vpop.xlane.xlu0 %378
    %380 = vmax.xlane.f32.xlu0 %v355
    %v381 = vpop.xlane.xlu0 %380
    %382 = vmax.xlane.f32.xlu0 %v360
    %v383 = vpop.xlane.xlu0 %382
    %384 = vmax.xlane.f32.xlu0 %v363
    %v385 = vpop.xlane.xlu0 %384
    %386 = vmax.xlane.f32.xlu0 %v368
    %v387 = vpop.xlane.xlu0 %386
    %388 = vmax.xlane.f32.xlu0 %v371
    %v389 = vpop.xlane.xlu0 %388
    %v390 = vsub.f32 %v344, %v375
    %v391 = vsub.f32 %v347, %v377
    %v392 = vsub.f32 %v352, %v379
    %v393 = vsub.f32 %v355, %v381
    %v394 = vsub.f32 %v360, %v383
    %v395 = vsub.f32 %v363, %v385
    %v396 = vsub.f32 %v368, %v387
    %v397 = vsub.f32 %v371, %v389
    %v398 = vmul.f32 %v390, 1.442695
    %v399 = vpow.pop %v398
    %v400 = vmul.f32 %v391, 1.442695
    %v401 = vpow.pop %v400
    %v402 = vmul.f32 %v392, 1.442695
    %v403 = vpow.pop %v402
    %v404 = vmul.f32 %v393, 1.442695
    %v405 = vpow.pop %v404
    %v406 = vmul.f32 %v394, 1.442695
    %v407 = vpow.pop %v406
    %v408 = vmul.f32 %v395, 1.442695
    %v409 = vpow.pop %v408
    %v410 = vmul.f32 %v396, 1.442695
    %v411 = vpow.pop %v410
    %v412 = vmul.f32 %v397, 1.442695
    %v413 = vpow.pop %v412
    %414 = vadd.xlane.f32.xlu0 %v399
    %v415 = vpop.xlane.xlu0 %414
    %416 = vadd.xlane.f32.xlu0 %v401
    %v417 = vpop.xlane.xlu0 %416
    %418 = vadd.xlane.f32.xlu0 %v403
    %v419 = vpop.xlane.xlu0 %418
    %420 = vadd.xlane.f32.xlu0 %v405
    %v421 = vpop.xlane.xlu0 %420
    %422 = vadd.xlane.f32.xlu0 %v407
    %v423 = vpop.xlane.xlu0 %422
    %424 = vadd.xlane.f32.xlu0 %v409
    %v425 = vpop.xlane.xlu0 %424
    %426 = vadd.xlane.f32.xlu0 %v411
    %v427 = vpop.xlane.xlu0 %426
    %428 = vadd.xlane.f32.xlu0 %v413
    %v429 = vpop.xlane.xlu0 %428
    %v430 = vrcp.pop %v415
    %v431 = vrcp.pop %v417
    %v432 = vrcp.pop %v419
    %v433 = vrcp.pop %v421
    %v434 = vrcp.pop %v423
    %v435 = vrcp.pop %v425
    %v436 = vrcp.pop %v427
    %v437 = vrcp.pop %v429
    %v438 = vmul.f32 %v399, %v430
    %v439 = vmul.f32 %v401, %v431
    %v440 = vmul.f32 %v403, %v432
    %v441 = vmul.f32 %v405, %v433
    %v442 = vmul.f32 %v407, %v434
    %v443 = vmul.f32 %v409, %v435
    %v444 = vmul.f32 %v411, %v436
    %v445 = vmul.f32 %v413, %v437
    %v446 = vld [vmem:[%s3] sm:$0x1]
    %v448 = vlaneseq
    %v449 = vshrl.u32 %v448, 7
    %v450 = vsub.s32 0, %v449
    %v451 = vrot.slane %v446, %v450
    %v453 = vadd.f32 %v204, %v451
    %v454 = vadd.f32 %v207, %v451
    %v455 = vadd.f32 %v212, %v451
    %v456 = vadd.f32 %v215, %v451
    %v457 = vadd.f32 %v220, %v451
    %v458 = vadd.f32 %v223, %v451
    %v459 = vadd.f32 %v228, %v451
    %v460 = vadd.f32 %v231, %v451
    %v461 = vmul.f32 %v453, %v438
    %v462 = vmul.f32 %v454, %v439
    %v463 = vmul.f32 %v455, %v440
    %v464 = vmul.f32 %v456, %v441
    %v465 = vmul.f32 %v457, %v442
    %v466 = vmul.f32 %v458, %v443
    %v467 = vmul.f32 %v459, %v444
    %v468 = vmul.f32 %v460, %v445
    %469 = vst [vmem:[#allocation8] sm:$0xff] %v461
    %470 = vst [vmem:[#allocation8 + $0x8] sm:$0xff] %v462
    %471 = vst [vmem:[#allocation8 + $0x10] sm:$0xff] %v463
    %472 = vst [vmem:[#allocation8 + $0x18] sm:$0xff] %v464
    %473 = vst [vmem:[#allocation8 + $0x20] sm:$0xff] %v465
    %474 = vst [vmem:[#allocation8 + $0x28] sm:$0xff] %v466
    %475 = vst [vmem:[#allocation8 + $0x30] sm:$0xff] %v467
    %476 = vst [vmem:[#allocation8 + $0x38] sm:$0xff] %v468
    // Predicated region
    $region38: #{tpu_custom_call.1} parent=1 // pred_check
      _
    $region39: #{tpu_custom_call.1} parent=1 // pred_check_branch
      %478 = sbr.rel (0) target = $region41
    $region40: #{tpu_custom_call.1} parent=1 // pred_region
      %s480 = ssub.s32 1024, 1024
      %481 = vsyncadd [#allocation4], %s480
      %s482 = sshll.u32 [#allocation8], 4
      %s483 = int_to_ptr.vmem [resolvable:$true] %s482
      %488 = dma.vmem_to_hbm [thread:$0]  %s483, 1024, %s6, [#allocation4], 128, 128, 8
    $region41: #{tpu_custom_call.1} parent=1 // pred_fallthru
      _
    // Predicated region
    $region42: #{tpu_custom_call.1} parent=1 // pred_check
      _
    $region43: #{tpu_custom_call.1} parent=1 // pred_check_branch
      %490 = sbr.rel (0) target = $region45
    $region44: #{tpu_custom_call.1} parent=1 // pred_region
      %491 = dma.done [#allocation4], 1024
    $region45: #{tpu_custom_call.1} parent=1 // pred_fallthru
      _
    %492 = vsyncpa [#allocation3], 1
    %493 = vsyncpa [#allocation6], 1
    %494 = vsyncpa [#allocation4], 1

</llo_original>
